<compile_context>
chip_gen: v6e
topology: v6e:2x2x1
jax: 0.10.0
libtpu: 0.0.40
codegen_flags: <defaults>
</compile_context>

<pallas_src>
import functools
import numpy as np
import jax
import jax.numpy as jnp
from jax.experimental import pallas as pl
from jax.experimental.pallas import tpu as pltpu

LANE = 128


def _round_up(n, m):
    return (n + m - 1) // m * m


def _pick_tiles(n):
    """Pad node count and choose (tm, tk) tiles for the N x N adjacency."""
    if n <= 2048:
        n_pad = max(_round_up(n, 256), 256)
        tk = n_pad                      # whole reduction in one tile
    else:
        n_pad = _round_up(n, 1024)      # pad so a wide tk always divides
        tk = 1024
    tm = 256                            # row tile (MXU-native on v6e/v7x)
    while n_pad // tm < 2 and tm > 8:   # guarantee >=2 row tiles (v7x megacore)
        tm //= 2
    return n_pad, tm, tk


def graphconv_kernel(a_ref, x_agg_ref, x_root_ref, w_rel_ref, w_root_ref,
                     b_ref, out_ref, acc_ref, *, apply_relu, x_resident, tk):
    """One tiled GraphConv layer.

    Grid = (row tiles i, source/reduction tiles k).
      acc[i] = sum_k A[i,k] @ x[k]                 (neighbor-sum, bf16 MXU, f32 acc)
      out[i] = relu?( acc[i] @ W_rel + x[i] @ W_root + b )
    """
    k = pl.program_id(1)

    @pl.when(k == 0)
    def _init():
        acc_ref[...] = jnp.zeros_like(acc_ref)

    if x_resident:
        start = pl.multiple_of(k * tk, tk)
        xk = x_agg_ref[pl.ds(start, tk), :]        # slice the VMEM-resident x
    else:
        xk = x_agg_ref[...]

    # bf16 x bf16 -> f32 accumulate: full-rate MXU path, no in-kernel widen of A.
    acc_ref[...] += jnp.dot(a_ref[...], xk, preferred_element_type=jnp.float32)

    @pl.when(k == pl.num_programs(1) - 1)
    def _finalize():
        out = jnp.dot(acc_ref[...], w_rel_ref[...],
                      preferred_element_type=jnp.float32)
        out = out + jnp.dot(x_root_ref[...].astype(jnp.float32), w_root_ref[...],
                            preferred_element_type=jnp.float32)
        out = out + b_ref[...]
        if apply_relu:
            out = jnp.maximum(out, 0.0)
        out_ref[...] = out.astype(out_ref.dtype)


def _graphconv_layer(a_bf16, x_pad, w_rel, w_root, b_pad, *, apply_relu,
                     tm, tk, out_dtype):
    n_pad, f_pad = x_pad.shape
    o_pad = w_rel.shape[1]
    grid = (n_pad // tm, n_pad // tk)

    # Keep x VMEM-resident when it fits comfortably (DMA'd once, never re-streamed).
    x_resident = n_pad * f_pad * 2 <= 8 * 1024 * 1024
    if x_resident:
        x_agg_spec = pl.BlockSpec((n_pad, f_pad), lambda i, k: (0, 0))
    else:
        x_agg_spec = pl.BlockSpec((tk, f_pad), lambda i, k: (k, 0))

    # Double-buffered VMEM footprint -> vmem limit (cap under v7x's 64 MiB).
    a_bytes = 2 * tm * tk * 2
    x_bytes = (2 * n_pad * f_pad * 2) if x_resident else (2 * tk * f_pad * 2)
    root_bytes = 2 * tm * f_pad * 2
    w_bytes = 2 * 2 * f_pad * o_pad * 4
    out_bytes = 2 * tm * o_pad * 4
    acc_bytes = tm * f_pad * 4
    footprint = a_bytes + x_bytes + root_bytes + w_bytes + out_bytes + acc_bytes
    vmem_limit = min(max(32 << 20, int(footprint * 1.5)), 48 << 20)

    out_size = 2 if out_dtype == jnp.bfloat16 else 4
    flops = 2 * n_pad * n_pad * f_pad + 2 * n_pad * (2 * f_pad) * o_pad
    x_reads = 1 if x_resident else (n_pad // tm)
    bytes_accessed = (n_pad * n_pad * 2                   # A (bf16) -- dominant
                      + x_reads * n_pad * f_pad * 2       # x (agg, bf16)
                      + n_pad * f_pad * 2                 # x (root, bf16)
                      + n_pad * o_pad * out_size          # output
                      + (w_rel.size + w_root.size + b_pad.size) * 4)

    kernel = functools.partial(graphconv_kernel, apply_relu=apply_relu,
                               x_resident=x_resident, tk=tk)
    return pl.pallas_call(
        kernel,
        out_shape=jax.ShapeDtypeStruct((n_pad, o_pad), out_dtype),
        grid_spec=pltpu.PrefetchScalarGridSpec(
            num_scalar_prefetch=0,
            grid=grid,
            in_specs=[
                pl.BlockSpec((tm, tk), lambda i, k: (i, k)),          # A tile (bf16)
                x_agg_spec,                                           # x rows (agg)
                pl.BlockSpec((tm, f_pad), lambda i, k: (i, 0)),       # x rows (root)
                pl.BlockSpec((f_pad, o_pad), lambda i, k: (0, 0)),    # W_rel
                pl.BlockSpec((f_pad, o_pad), lambda i, k: (0, 0)),    # W_root
                pl.BlockSpec((1, o_pad), lambda i, k: (0, 0)),        # bias
            ],
            out_specs=pl.BlockSpec((tm, o_pad), lambda i, k: (i, 0)),
            scratch_shapes=[pltpu.VMEM((tm, f_pad), jnp.float32)],
        ),
        compiler_params=pltpu.CompilerParams(
            dimension_semantics=("parallel", "arbitrary"),
            vmem_limit_bytes=vmem_limit,
        ),
        cost_estimate=pl.CostEstimate(
            flops=int(flops), transcendentals=0,
            bytes_accessed=int(bytes_accessed)),
    )(a_bf16, x_pad, x_pad, w_rel, w_root, b_pad)


def graph_forward(x, edge_index, params):
    """conv1 -> relu -> conv2 via two tiled Pallas GraphConv layers."""
    n, fin = x.shape
    hid = params["w1_rel"].shape[1]
    fout = params["w2_rel"].shape[1]

    n_pad, tm, tk = _pick_tiles(n)
    f_pad = _round_up(fin, LANE)
    h_pad = _round_up(hid, LANE)
    o_pad = _round_up(fout, LANE)

    # Dense adjacency A[dst, src] += 1 (PyG 'add' aggregation), built directly in
    # bf16 (exact for per-pair edge multiplicities <= 256; padded rows/cols stay 0).
    a_bf16 = jnp.zeros((n_pad, n_pad), jnp.bfloat16)
    a_bf16 = a_bf16.at[edge_index[1], edge_index[0]].add(1.0)

    # Features carried in bf16 in HBM; f32 accumulation happens inside the kernel.
    x_pad = jnp.zeros((n_pad, f_pad), jnp.bfloat16).at[:n, :fin].set(
        x.astype(jnp.bfloat16))

    def pad2(w, r, c):
        return jnp.zeros((r, c), jnp.float32).at[:w.shape[0], :w.shape[1]].set(w)

    w1_rel = pad2(params["w1_rel"], f_pad, h_pad)
    w1_root = pad2(params["w1_root"], f_pad, h_pad)
    b1 = pad2(params["b1"], 1, h_pad)
    w2_rel = pad2(params["w2_rel"], h_pad, o_pad)
    w2_root = pad2(params["w2_root"], h_pad, o_pad)
    b2 = pad2(params["b2"], 1, o_pad)

    h1 = _graphconv_layer(a_bf16, x_pad, w1_rel, w1_root, b1,
                          apply_relu=True, tm=tm, tk=tk, out_dtype=jnp.bfloat16)
    out = _graphconv_layer(a_bf16, h1, w2_rel, w2_root, b2,
                           apply_relu=False, tm=tm, tk=tk, out_dtype=jnp.float32)
    return out[:n, :fout]


def init_params(key, input_dim, hidden_dim, output_dim):
    """Deterministic synthetic weights, stored as [in, out]."""
    k = jax.random.split(key, 6)
    s1 = 1.0 / np.sqrt(input_dim)
    s2 = 1.0 / np.sqrt(hidden_dim)
    return {
        "w1_rel":  jax.random.uniform(k[0], (input_dim, hidden_dim), jnp.float32, -s1, s1),
        "w1_root": jax.random.uniform(k[1], (input_dim, hidden_dim), jnp.float32, -s1, s1),
        "b1":      jax.random.uniform(k[2], (1, hidden_dim),          jnp.float32, -s1, s1),
        "w2_rel":  jax.random.uniform(k[3], (hidden_dim, output_dim), jnp.float32, -s2, s2),
        "w2_root": jax.random.uniform(k[4], (hidden_dim, output_dim), jnp.float32, -s2, s2),
        "b2":      jax.random.uniform(k[5], (1, output_dim),          jnp.float32, -s2, s2),
    }


def reference_forward(x, edge_index, params):
    """Pure-JAX f32 reference implementing the same PyG GraphConv math."""
    n = x.shape[0]
    a = jnp.zeros((n, n), jnp.float32).at[edge_index[1], edge_index[0]].add(1.0)
    h1 = a @ x @ params["w1_rel"] + x @ params["w1_root"] + params["b1"]
    h1 = jnp.maximum(h1, 0.0)
    return a @ h1 @ params["w2_rel"] + h1 @ params["w2_root"] + params["b2"]


if __name__ == "__main__":
    num_nodes, input_dim, hidden_dim, output_dim = 16, 8, 32, 16
    num_edges = 32

    key = jax.random.PRNGKey(0)
    kx, ke, kp = jax.random.split(key, 3)

    x = jax.random.normal(kx, (num_nodes, input_dim), jnp.float32)
    edge_index = jax.random.randint(ke, (2, num_edges), 0, num_nodes, jnp.int32)
    params = init_params(kp, input_dim, hidden_dim, output_dim)

    out = graph_forward(x, edge_index, params)
    out = jax.block_until_ready(out)

    ref = reference_forward(x, edge_index, params)
    # bf16 feature/activation streams -> loosened tolerance vs f32 reference.
    np.testing.assert_allclose(np.asarray(out), np.asarray(ref),
                               rtol=2e-2, atol=2e-2)

    print("KERNEL_OK")
</pallas_src>

<mosaic_0001>
module attributes {stable_mosaic.version = 11 : i64} {
  func.func @graphconv_kernel(%arg0: i32, %arg1: i32, %arg2: memref<128x256xbf16, #tpu.memory_space<vmem>>, %arg3: memref<256x128xbf16, #tpu.memory_space<vmem>>, %arg4: memref<128x128xbf16, #tpu.memory_space<vmem>>, %arg5: memref<128x128xf32, #tpu.memory_space<vmem>>, %arg6: memref<128x128xf32, #tpu.memory_space<vmem>>, %arg7: memref<1x128xf32, #tpu.memory_space<vmem>>, %arg8: memref<128x128xbf16, #tpu.memory_space<vmem>>, %arg9: memref<128x128xf32, #tpu.memory_space<vmem>>) attributes {dimension_semantics = [#tpu.dimension_semantics<parallel>, #tpu.dimension_semantics<arbitrary>], iteration_bounds = array<i64: 2, 1>, scalar_prefetch = 0 : i64, scratch_operands = 1 : i64, tpu.core_type = #tpu.core_type<tc>, window_params = [{transform_indices = @transform_0, window_bounds = array<i64: 128, 256>}, {pipeline_mode = #tpu.pipeline_mode<synchronous>, transform_indices = @transform_1, window_bounds = array<i64: 256, 128>}, {transform_indices = @transform_2, window_bounds = array<i64: 128, 128>}, {pipeline_mode = #tpu.pipeline_mode<synchronous>, transform_indices = @transform_3, window_bounds = array<i64: 128, 128>}, {pipeline_mode = #tpu.pipeline_mode<synchronous>, transform_indices = @transform_4, window_bounds = array<i64: 128, 128>}, {pipeline_mode = #tpu.pipeline_mode<synchronous>, transform_indices = @transform_5, window_bounds = array<i64: 1, 128>}, {transform_indices = @transform_6, window_bounds = array<i64: 128, 128>}]} {
    %c0_i32 = arith.constant 0 : i32
    %0 = arith.cmpi eq, %arg1, %c0_i32 : i32
    %1 = arith.extui %0 : i1 to i32
    %c0_i32_0 = arith.constant 0 : i32
    %2 = arith.cmpi ne, %1, %c0_i32_0 : i32
    scf.if %2 {
      %cst_9 = arith.constant 0.000000e+00 : f32
      %15 = vector.broadcast %cst_9 : f32 to vector<128x128xf32>
      %c0_10 = arith.constant 0 : index
      %c0_11 = arith.constant 0 : index
      %16 = vector.load %arg9[%c0_10, %c0_11] : memref<128x128xf32, #tpu.memory_space<vmem>>, vector<128x128xf32>
      tpu.vector_store %arg9[%c0_10, %c0_11], %15 {strides = array<i32>} : memref<128x128xf32, #tpu.memory_space<vmem>>, vector<128x128xf32>,
    } else {
    }
    %c256_i32 = arith.constant 256 : i32
    %3 = arith.muli %arg1, %c256_i32 : i32
    %4 = tpu.assume_multiple %3, 256 : i32
    %5 = arith.index_cast %4 : i32 to index
    %c0 = arith.constant 0 : index
    %6 = vector.load %arg3[%5, %c0] : memref<256x128xbf16, #tpu.memory_space<vmem>>, vector<256x128xbf16>
    %c0_1 = arith.constant 0 : index
    %c0_2 = arith.constant 0 : index
    %7 = vector.load %arg9[%c0_1, %c0_2] : memref<128x128xf32, #tpu.memory_space<vmem>>, vector<128x128xf32>
    %c0_3 = arith.constant 0 : index
    %c0_4 = arith.constant 0 : index
    %8 = vector.load %arg2[%c0_3, %c0_4] : memref<128x256xbf16, #tpu.memory_space<vmem>>, vector<128x256xbf16>
    %cst = arith.constant dense<0.000000e+00> : vector<128x128xf32>
    %9 = tpu.matmul %8, %6, %cst {dimension_numbers = #tpu.dot_dimension_numbers<[1], [0], [0], [1], [0, 0, 1, 1], [], []>} : vector<128x256xbf16>, vector<256x128xbf16>, vector<128x128xf32> -> vector<128x128xf32>
    %10 = arith.addf %7, %9 : vector<128x128xf32>
    %c0_5 = arith.constant 0 : index
    %c0_6 = arith.constant 0 : index
    %11 = vector.load %arg9[%c0_5, %c0_6] : memref<128x128xf32, #tpu.memory_space<vmem>>, vector<128x128xf32>
    tpu.vector_store %arg9[%c0_5, %c0_6], %10 {strides = array<i32>} : memref<128x128xf32, #tpu.memory_space<vmem>>, vector<128x128xf32>,
    %c0_i32_7 = arith.constant 0 : i32
    %12 = arith.cmpi eq, %arg1, %c0_i32_7 : i32
    %13 = arith.extui %12 : i1 to i32
    %c0_i32_8 = arith.constant 0 : i32
    %14 = arith.cmpi ne, %13, %c0_i32_8 : i32
    scf.if %14 {
      %c0_9 = arith.constant 0 : index
      %c0_10 = arith.constant 0 : index
      %15 = vector.load %arg9[%c0_9, %c0_10] : memref<128x128xf32, #tpu.memory_space<vmem>>, vector<128x128xf32>
      %c0_11 = arith.constant 0 : index
      %c0_12 = arith.constant 0 : index
      %16 = vector.load %arg5[%c0_11, %c0_12] : memref<128x128xf32, #tpu.memory_space<vmem>>, vector<128x128xf32>
      %cst_13 = arith.constant dense<0.000000e+00> : vector<128x128xf32>
      %17 = tpu.matmul %15, %16, %cst_13 {dimension_numbers = #tpu.dot_dimension_numbers<[1], [0], [0], [1], [0, 0, 1, 1], [], []>} : vector<128x128xf32>, vector<128x128xf32>, vector<128x128xf32> -> vector<128x128xf32>
      %c0_14 = arith.constant 0 : index
      %c0_15 = arith.constant 0 : index
      %18 = vector.load %arg4[%c0_14, %c0_15] : memref<128x128xbf16, #tpu.memory_space<vmem>>, vector<128x128xbf16>
      %19 = arith.extf %18 : vector<128x128xbf16> to vector<128x128xf32>
      %c0_16 = arith.constant 0 : index
      %c0_17 = arith.constant 0 : index
      %20 = vector.load %arg6[%c0_16, %c0_17] : memref<128x128xf32, #tpu.memory_space<vmem>>, vector<128x128xf32>
      %cst_18 = arith.constant dense<0.000000e+00> : vector<128x128xf32>
      %21 = tpu.matmul %19, %20, %cst_18 {dimension_numbers = #tpu.dot_dimension_numbers<[1], [0], [0], [1], [0, 0, 1, 1], [], []>} : vector<128x128xf32>, vector<128x128xf32>, vector<128x128xf32> -> vector<128x128xf32>
      %22 = arith.addf %17, %21 : vector<128x128xf32>
      %c0_19 = arith.constant 0 : index
      %c0_20 = arith.constant 0 : index
      %23 = vector.load %arg7[%c0_19, %c0_20] : memref<1x128xf32, #tpu.memory_space<vmem>>, vector<1x128xf32>
      %24 = vector.broadcast %23 : vector<1x128xf32> to vector<128x128xf32>
      %25 = arith.addf %22, %24 : vector<128x128xf32>
      %cst_21 = arith.constant 0.000000e+00 : f32
      %26 = vector.broadcast %cst_21 : f32 to vector<128x128xf32>
      %27 = arith.maximumf %25, %26 : vector<128x128xf32>
      %28 = arith.truncf %27 : vector<128x128xf32> to vector<128x128xbf16>
      %c0_22 = arith.constant 0 : index
      %c0_23 = arith.constant 0 : index
      %29 = vector.load %arg8[%c0_22, %c0_23] : memref<128x128xbf16, #tpu.memory_space<vmem>>, vector<128x128xbf16>
      tpu.vector_store %arg8[%c0_22, %c0_23], %28 {strides = array<i32>} : memref<128x128xbf16, #tpu.memory_space<vmem>>, vector<128x128xbf16>,
    } else {
    }
    return
  }
  func.func @transform_0(%arg0: i32, %arg1: i32) -> (i32, i32) {
    %c0_i32 = arith.constant 0 : i32
    return %arg0, %arg1 : i32, i32
  }
  func.func @transform_1(%arg0: i32, %arg1: i32) -> (i32, i32) {
    %c0_i32 = arith.constant 0 : i32
    %c0_i32_0 = arith.constant 0 : i32
    %c0_i32_1 = arith.constant 0 : i32
    return %c0_i32, %c0_i32_0 : i32, i32
  }
  func.func @transform_2(%arg0: i32, %arg1: i32) -> (i32, i32) {
    %c0_i32 = arith.constant 0 : i32
    %c0_i32_0 = arith.constant 0 : i32
    return %arg0, %c0_i32 : i32, i32
  }
  func.func @transform_3(%arg0: i32, %arg1: i32) -> (i32, i32) {
    %c0_i32 = arith.constant 0 : i32
    %c0_i32_0 = arith.constant 0 : i32
    %c0_i32_1 = arith.constant 0 : i32
    return %c0_i32, %c0_i32_0 : i32, i32
  }
  func.func @transform_4(%arg0: i32, %arg1: i32) -> (i32, i32) {
    %c0_i32 = arith.constant 0 : i32
    %c0_i32_0 = arith.constant 0 : i32
    %c0_i32_1 = arith.constant 0 : i32
    return %c0_i32, %c0_i32_0 : i32, i32
  }
  func.func @transform_5(%arg0: i32, %arg1: i32) -> (i32, i32) {
    %c0_i32 = arith.constant 0 : i32
    %c0_i32_0 = arith.constant 0 : i32
    %c0_i32_1 = arith.constant 0 : i32
    return %c0_i32, %c0_i32_0 : i32, i32
  }
  func.func @transform_6(%arg0: i32, %arg1: i32) -> (i32, i32) {
    %c0_i32 = arith.constant 0 : i32
    %c0_i32_0 = arith.constant 0 : i32
    return %arg0, %c0_i32 : i32, i32
  }
}

</mosaic_0001>

<llo_original>
// kernel: tpu_custom_call.1
$region0: #{tpu_custom_call.1}
  #allocation0 [shape = 'u32[]', space=smem, size = 0x4, offset = 0x4, fixed_abs, tag = 'smem constant byte address 0x4 - core index']
  #allocation1 [shape = 'u32[144,128]{1,0:T(1,128)}', space=vmem, size = 0x12000, scoped, tag = 'internal scratch']
  #allocation2 [shape = 'f32[128,128]{1,0:T(8,128)}', space=vmem, size = 0x10000, scoped, tag = 'scratch operand']
  %s0 = inlined_call_operand.hbm [shape: bf16[256,256], index: 0, kind: input, shape index: {}]
  %s1 = inlined_call_operand.hbm [shape: bf16[256,128], index: 1, kind: input, shape index: {}]
  %s2 = inlined_call_operand.hbm [shape: bf16[256,128], index: 2, kind: input, shape index: {}]
  %s3 = inlined_call_operand.hbm [shape: f32[128,128], index: 3, kind: input, shape index: {}]
  %s4 = inlined_call_operand.hbm [shape: f32[128,128], index: 4, kind: input, shape index: {}]
  %s5 = inlined_call_operand.vmem [shape: f32[1,128], index: 5, kind: input, shape index: {}]
  %s6 = inlined_call_operand.hbm [shape: bf16[256,128], index: 6, kind: output, shape index: {}]
  %s7 = sld [smem:[#allocation0]]
  $region85: #{tpu_custom_call.1} parent=0
    _
  %s9 = ssub.s32 1, %s7
  %s10 = scalar_select 0, %s9, %s7
  $region1: #{tpu_custom_call.1} parent=0
    #allocation3 [shape = 'u8[131072]{0}', space=vmem, size = 0x20000, scoped, tag = 'input window, operand 0']
    #allocation4 [shape = 's32[2]{0}', space=sflag, size = 0x8, scoped, tag = 'scoped memory for tpu_custom_call.1']
    #allocation5 [shape = 's32[2]{0}', space=sflag, size = 0x8, scoped, tag = 'scoped memory for tpu_custom_call.1']
    #allocation6 [shape = 'u8[65536]{0}', space=vmem, size = 0x10000, scoped, tag = 'input window, operand 1, single buffered']
    #allocation7 [shape = 's32[1]{0}', space=sflag, size = 0x4, scoped, tag = 'scoped memory for tpu_custom_call.1']
    #allocation8 [shape = 'u8[65536]{0}', space=vmem, size = 0x10000, scoped, tag = 'input window, operand 2']
    #allocation9 [shape = 'u8[65536]{0}', space=vmem, size = 0x10000, scoped, tag = 'input window, operand 3, single buffered']
    #allocation10 [shape = 'u8[65536]{0}', space=vmem, size = 0x10000, scoped, tag = 'input window, operand 4, single buffered']
    #allocation11 [shape = 's32[1]{0}', space=sflag, size = 0x4, scoped, tag = 'scoped memory for tpu_custom_call.1']
    #allocation12 [shape = 'u8[65536]{0}', space=vmem, size = 0x10000, scoped, tag = 'output window, operand 0']
    %11 = vsyncpa [#allocation4], 0
    %s12 = scalar_lea.sflag [#allocation4], 1
    %13 = vsyncpa %s12, 0
    %14 = vsyncpa [#allocation7], 0
    %15 = vsyncpa [#allocation11], 0
    %16 = vsyncpa [#allocation5], 0
    %s17 = scalar_lea.sflag [#allocation5], 1
    %18 = vsyncpa %s17, 0
    loop: start=0, step=1, limit=4
    $region2: #{tpu_custom_call.1} parent=1 // loop_pre_header
      _
    $region3: #{tpu_custom_call.1} parent=1 // loop_header
      %s20 = sphi 0, %s24
      %p21 = scmp.ge.s32.totalorder %s20, 4
      %s27 = sphi 0, %s39
      %s28 = sphi 0, %s35
      %s29 = sphi 0, %s27
      %s30 = sphi 0, %s28
      %s31 = sphi 0, %s29
      %s32 = sphi 0, %s30
      %s44 = sphi 0, %s46
      %s47 = sphi 0, %s44
      %s48 = sphi 0, %s47
      %s64 = sphi 0, %s48
      %s68 = sphi 0, %s68
      %s70 = sphi 0, %s68
      %s71 = sphi 0, %s70
      %s85 = sphi 0, %s71
      %s91 = sphi 0, %s93
      %s94 = sphi 0, %s91
      %s95 = sphi 0, %s94
      %s111 = sphi 0, %s95
      %s115 = sphi 0, %s115
      %s117 = sphi 0, %s115
      %s118 = sphi 0, %s117
      %s132 = sphi 0, %s118
      %s136 = sphi 0, %s136
      %s138 = sphi 0, %s136
      %s139 = sphi 0, %s138
      %s153 = sphi 0, %s139
      %s157 = sphi 0, %s157
      %s159 = sphi 0, %s157
      %s160 = sphi 0, %s159
      %s174 = sphi 0, %s160
      %s180 = sphi 0, %s182
      %s183 = sphi 0, %s180
      %s184 = sphi 0, %s183
      %s200 = sphi 0, %s184
    $region4: #{tpu_custom_call.1} parent=1 // loop_header_branch
      %23 = sbr.rel (%p21) target = $region8
    $region5: #{tpu_custom_call.1} parent=1 // loop_body
      %s25 = ssub.s32 %s20, 1
      %s26 = ssub.s32 %s20, 2
      %s33 = sadd.s32 1, %s28
      %p34 = scmp.ge.s32.totalorder %s33, 1
      %s35 = scalar_select %p34, 0, %s33
      %s36 = sadd.s32 1, %s27
      %s37 = scalar_select %p34, %s36, %s27
      %p38 = scmp.ge.s32.totalorder %s37, 2
      %s39 = scalar_select %p38, 0, %s37
      %s40 = ssub.s32 %s27, %s39
      %s41 = ssub.s32 %s28, %s35
      %s42 = sor.u32 %s40, %s41
      %p43 = scmp.eq.s32.totalorder %s42, 0
      %s45 = sadd.s32 %s44, 1
      %s46 = scalar_select %p43, %s44, %s45
      %p49 = pneg %p43
      %p50 = scmp.eq.s32.totalorder %s20, 1
      %p51 = por %p49, %p50
      %p52 = scmp.ne.s32.totalorder %s44, %s47
      %p53 = scmp.eq.s32.totalorder %s20, 0
      %p54 = por %p52, %p53
      %p55 = scmp.ne.s32.totalorder %s44, %s47
      %p56 = scmp.eq.s32.totalorder %s25, 1
      %p57 = por %p55, %p56
      %p58 = scmp.ne.s32.totalorder %s47, %s48
      %p59 = scmp.eq.s32.totalorder %s25, 0
      %p60 = por %p58, %p59
      %p61 = scmp.ne.s32.totalorder %s47, %s48
      %p62 = scmp.eq.s32.totalorder %s26, 1
      %p63 = por %p61, %p62
      %p65 = scmp.ne.s32.totalorder %s48, %s64
      %p66 = scmp.eq.s32.totalorder %s26, 0
      %p67 = por %p65, %p66
      %s69 = sadd.s32 %s68, 1
      %p72 = scmp.eq.s32.totalorder %s20, 1
      %p73 = scmp.ne.s32.totalorder %s68, %s70
      %p74 = scmp.eq.s32.totalorder %s20, 0
      %p75 = por %p73, %p74
      %p76 = scmp.ne.s32.totalorder %s68, %s70
      %p77 = scmp.eq.s32.totalorder %s25, 1
      %p78 = por %p76, %p77
      %p79 = scmp.ne.s32.totalorder %s70, %s71
      %p80 = scmp.eq.s32.totalorder %s25, 0
      %p81 = por %p79, %p80
      %p82 = scmp.ne.s32.totalorder %s70, %s71
      %p83 = scmp.eq.s32.totalorder %s26, 1
      %p84 = por %p82, %p83
      %p86 = scmp.ne.s32.totalorder %s71, %s85
      %p87 = scmp.eq.s32.totalorder %s26, 0
      %p88 = por %p86, %p87
      %s89 = ssub.s32 %s27, %s39
      %p90 = scmp.eq.s32.totalorder %s89, 0
      %s92 = sadd.s32 %s91, 1
      %s93 = scalar_select %p90, %s91, %s92
      %p96 = pneg %p90
      %p97 = scmp.eq.s32.totalorder %s20, 1
      %p98 = por %p96, %p97
      %p99 = scmp.ne.s32.totalorder %s91, %s94
      %p100 = scmp.eq.s32.totalorder %s20, 0
      %p101 = por %p99, %p100
      %p102 = scmp.ne.s32.totalorder %s91, %s94
      %p103 = scmp.eq.s32.totalorder %s25, 1
      %p104 = por %p102, %p103
      %p105 = scmp.ne.s32.totalorder %s94, %s95
      %p106 = scmp.eq.s32.totalorder %s25, 0
      %p107 = por %p105, %p106
      %p108 = scmp.ne.s32.totalorder %s94, %s95
      %p109 = scmp.eq.s32.totalorder %s26, 1
      %p110 = por %p108, %p109
      %p112 = scmp.ne.s32.totalorder %s95, %s111
      %p113 = scmp.eq.s32.totalorder %s26, 0
      %p114 = por %p112, %p113
      %s116 = sadd.s32 %s115, 1
      %p119 = scmp.eq.s32.totalorder %s20, 1
      %p120 = scmp.ne.s32.totalorder %s115, %s117
      %p121 = scmp.eq.s32.totalorder %s20, 0
      %p122 = por %p120, %p121
      %p123 = scmp.ne.s32.totalorder %s115, %s117
      %p124 = scmp.eq.s32.totalorder %s25, 1
      %p125 = por %p123, %p124
      %p126 = scmp.ne.s32.totalorder %s117, %s118
      %p127 = scmp.eq.s32.totalorder %s25, 0
      %p128 = por %p126, %p127
      %p129 = scmp.ne.s32.totalorder %s117, %s118
      %p130 = scmp.eq.s32.totalorder %s26, 1
      %p131 = por %p129, %p130
      %p133 = scmp.ne.s32.totalorder %s118, %s132
      %p134 = scmp.eq.s32.totalorder %s26, 0
      %p135 = por %p133, %p134
      %s137 = sadd.s32 %s136, 1
      %p140 = scmp.eq.s32.totalorder %s20, 1
      %p141 = scmp.ne.s32.totalorder %s136, %s138
      %p142 = scmp.eq.s32.totalorder %s20, 0
      %p143 = por %p141, %p142
      %p144 = scmp.ne.s32.totalorder %s136, %s138
      %p145 = scmp.eq.s32.totalorder %s25, 1
      %p146 = por %p144, %p145
      %p147 = scmp.ne.s32.totalorder %s138, %s139
      %p148 = scmp.eq.s32.totalorder %s25, 0
      %p149 = por %p147, %p148
      %p150 = scmp.ne.s32.totalorder %s138, %s139
      %p151 = scmp.eq.s32.totalorder %s26, 1
      %p152 = por %p150, %p151
      %p154 = scmp.ne.s32.totalorder %s139, %s153
      %p155 = scmp.eq.s32.totalorder %s26, 0
      %p156 = por %p154, %p155
      %s158 = sadd.s32 %s157, 1
      %p161 = scmp.eq.s32.totalorder %s20, 1
      %p162 = scmp.ne.s32.totalorder %s157, %s159
      %p163 = scmp.eq.s32.totalorder %s20, 0
      %p164 = por %p162, %p163
      %p165 = scmp.ne.s32.totalorder %s157, %s159
      %p166 = scmp.eq.s32.totalorder %s25, 1
      %p167 = por %p165, %p166
      %p168 = scmp.ne.s32.totalorder %s159, %s160
      %p169 = scmp.eq.s32.totalorder %s25, 0
      %p170 = por %p168, %p169
      %p171 = scmp.ne.s32.totalorder %s159, %s160
      %p172 = scmp.eq.s32.totalorder %s26, 1
      %p173 = por %p171, %p172
      %p175 = scmp.ne.s32.totalorder %s160, %s174
      %p176 = scmp.eq.s32.totalorder %s26, 0
      %p177 = por %p175, %p176
      %s178 = ssub.s32 %s27, %s39
      %p179 = scmp.eq.s32.totalorder %s178, 0
      %s181 = sadd.s32 %s180, 1
      %s182 = scalar_select %p179, %s180, %s181
      %p185 = pneg %p179
      %p186 = scmp.eq.s32.totalorder %s20, 1
      %p187 = por %p185, %p186
      %p188 = scmp.ne.s32.totalorder %s180, %s183
      %p189 = scmp.eq.s32.totalorder %s20, 0
      %p190 = por %p188, %p189
      %p191 = scmp.ne.s32.totalorder %s180, %s183
      %p192 = scmp.eq.s32.totalorder %s25, 1
      %p193 = por %p191, %p192
      %p194 = scmp.ne.s32.totalorder %s183, %s184
      %p195 = scmp.eq.s32.totalorder %s25, 0
      %p196 = por %p194, %p195
      %p197 = scmp.ne.s32.totalorder %s183, %s184
      %p198 = scmp.eq.s32.totalorder %s26, 1
      %p199 = por %p197, %p198
      %p201 = scmp.ne.s32.totalorder %s184, %s200
      %p202 = scmp.eq.s32.totalorder %s26, 0
      %p203 = por %p201, %p202
      %p204 = scmp.le.s32.totalorder 1, %s20
      %p205 = scmp.lt.s32.totalorder %s20, 3
      %p206 = pnand %p204, %p205
      %p207 = pneg %p206
      // Predicated region
      $region9: #{tpu_custom_call.1} parent=5 // pred_check
        _
      $region10: #{tpu_custom_call.1} parent=5 // pred_check_branch
        %209 = sbr.rel (%p206) target = $region12
      $region11: #{tpu_custom_call.1} parent=5 // pred_region
        %s210 = ssub.s32 %s20, 1
        // Predicated region
        $region13: #{tpu_custom_call.1} parent=11 // pred_check
          %p211 = pneg %p81
        $region14: #{tpu_custom_call.1} parent=11 // pred_check_branch
          %213 = sbr.rel (%p211) target = $region16
        $region15: #{tpu_custom_call.1} parent=11 // pred_region
          %s215 = ssub.s32 2048, 2048
          %216 = vsyncadd [#allocation7], %s215
          %s217 = sshll.u32 [#allocation6], 4
          %s218 = int_to_ptr.vmem [resolvable:$true] %s217
          %223 = dma.hbm_to_vmem [thread:$0]  %s1, 2048, %s218, [#allocation7], 64, 64, 4
        $region16: #{tpu_custom_call.1} parent=11 // pred_fallthru
          _
        // Predicated region
        $region17: #{tpu_custom_call.1} parent=11 // pred_check
          %p224 = pneg %p128
        $region18: #{tpu_custom_call.1} parent=11 // pred_check_branch
          %226 = sbr.rel (%p224) target = $region20
        $region19: #{tpu_custom_call.1} parent=11 // pred_region
          %s228 = ssub.s32 2048, 2048
          %229 = vsyncadd [#allocation7], %s228
          %s230 = sshll.u32 [#allocation9], 4
          %s231 = int_to_ptr.vmem [resolvable:$true] %s230
          %236 = dma.hbm_to_vmem [thread:$0]  %s3, 2048, %s231, [#allocation7], 128, 128, 8
        $region20: #{tpu_custom_call.1} parent=11 // pred_fallthru
          _
        // Predicated region
        $region21: #{tpu_custom_call.1} parent=11 // pred_check
          %p237 = pneg %p149
        $region22: #{tpu_custom_call.1} parent=11 // pred_check_branch
          %239 = sbr.rel (%p237) target = $region24
        $region23: #{tpu_custom_call.1} parent=11 // pred_region
          %s241 = ssub.s32 2048, 2048
          %242 = vsyncadd [#allocation11], %s241
          %s243 = sshll.u32 [#allocation10], 4
          %s244 = int_to_ptr.vmem [resolvable:$true] %s243
          %249 = dma.hbm_to_vmem [thread:$0]  %s4, 2048, %s244, [#allocation11], 128, 128, 8
        $region24: #{tpu_custom_call.1} parent=11 // pred_fallthru
          _
        // Predicated region
        $region25: #{tpu_custom_call.1} parent=11 // pred_check
          %p250 = pneg %p170
        $region26: #{tpu_custom_call.1} parent=11 // pred_check_branch
          %252 = sbr.rel (%p250) target = $region28
        $region27: #{tpu_custom_call.1} parent=11 // pred_region
          _
        $region28: #{tpu_custom_call.1} parent=11 // pred_fallthru
          _
      $region12: #{tpu_custom_call.1} parent=5 // pred_fallthru
        _
      %p253 = scmp.lt.s32.totalorder %s20, 2
      // Predicated region
      $region29: #{tpu_custom_call.1} parent=5 // pred_check
        %p254 = pneg %p253
      $region30: #{tpu_custom_call.1} parent=5 // pred_check_branch
        %256 = sbr.rel (%p254) target = $region32
      $region31: #{tpu_custom_call.1} parent=5 // pred_region
        // Predicated region
        $region33: #{tpu_custom_call.1} parent=31 // pred_check
          %p257 = pneg %p54
        $region34: #{tpu_custom_call.1} parent=31 // pred_check_branch
          %259 = sbr.rel (%p257) target = $region36
        $region35: #{tpu_custom_call.1} parent=31 // pred_region
          %s260 = sand.u32 %s20, 1
          %s261 = scalar_lea.sflag [#allocation4], %s260
          %s262 = sand.u32 %s44, 1
          %s263 = smul.addr %s262, 128
          %s264 = scalar_lea.vmem [#allocation3], %s263
          %s265 = smul.u32 16, %s27
          %s266 = smul.u32 2, %s28
          %s268 = ssub.s32 2048, 2048
          %269 = vsyncadd %s261, %s268
          %s270 = smul.addr %s265, 2
          %s271 = sadd.s32 %s266, %s270
          %s272 = smul.addr %s271, 64
          %s273 = scalar_lea.hbm %s0, %s272
          %s274 = sshll.u32 %s264, 4
          %s275 = int_to_ptr.vmem [resolvable:$true] %s274
          %280 = dma.hbm_to_vmem [thread:$0]  %s273, 2048, %s275, %s261, 128, 128, 8
        $region36: #{tpu_custom_call.1} parent=31 // pred_fallthru
          _
        // Predicated region
        $region37: #{tpu_custom_call.1} parent=31 // pred_check
          %p281 = pneg %p101
        $region38: #{tpu_custom_call.1} parent=31 // pred_check_branch
          %283 = sbr.rel (%p281) target = $region40
        $region39: #{tpu_custom_call.1} parent=31 // pred_region
          %s284 = sand.u32 %s20, 1
          %s285 = scalar_lea.sflag [#allocation4], %s284
          %s286 = sand.u32 %s91, 1
          %s287 = smul.addr %s286, 64
          %s288 = scalar_lea.vmem [#allocation8], %s287
          %s289 = smul.u32 16, %s27
          %s291 = ssub.s32 1024, 1024
          %292 = vsyncadd %s285, %s291
          %s293 = smul.addr %s289, 64
          %s294 = scalar_lea.hbm %s2, %s293
          %s295 = sshll.u32 %s288, 4
          %s296 = int_to_ptr.vmem [resolvable:$true] %s295
          %301 = dma.hbm_to_vmem [thread:$0]  %s294, 1024, %s296, %s285, 64, 64, 4
        $region40: #{tpu_custom_call.1} parent=31 // pred_fallthru
          _
      $region32: #{tpu_custom_call.1} parent=5 // pred_fallthru
        _
      %p302 = scmp.le.s32.totalorder 1, %s20
      %p303 = scmp.lt.s32.totalorder %s20, 3
      %p304 = pnand %p302, %p303
      %p305 = pneg %p304
      // Predicated region
      $region41: #{tpu_custom_call.1} parent=5 // pred_check
        _
      $region42: #{tpu_custom_call.1} parent=5 // pred_check_branch
        %307 = sbr.rel (%p304) target = $region44
      $region43: #{tpu_custom_call.1} parent=5 // pred_region
        %s308 = ssub.s32 %s20, 1
        %s309 = sand.u32 %s25, 1
        %s310 = scalar_lea.sflag [#allocation4], %s309
        %s311 = sand.u32 %s47, 1
        %s312 = smul.addr %s311, 128
        %s313 = scalar_lea.vmem [#allocation3], %s312
        // Predicated region
        $region45: #{tpu_custom_call.1} parent=43 // pred_check
          %p314 = pneg %p60
        $region46: #{tpu_custom_call.1} parent=43 // pred_check_branch
          %316 = sbr.rel (%p314) target = $region48
        $region47: #{tpu_custom_call.1} parent=43 // pred_region
          %317 = dma.done %s310, 2048
        $region48: #{tpu_custom_call.1} parent=43 // pred_fallthru
          _
        // Predicated region
        $region49: #{tpu_custom_call.1} parent=43 // pred_check
          %p318 = pneg %p81
        $region50: #{tpu_custom_call.1} parent=43 // pred_check_branch
          %320 = sbr.rel (%p318) target = $region52
        $region51: #{tpu_custom_call.1} parent=43 // pred_region
          %321 = dma.done [#allocation7], 2048
        $region52: #{tpu_custom_call.1} parent=43 // pred_fallthru
          _
        %s322 = sand.u32 %s25, 1
        %s323 = scalar_lea.sflag [#allocation4], %s322
        %s324 = sand.u32 %s94, 1
        %s325 = smul.addr %s324, 64
        %s326 = scalar_lea.vmem [#allocation8], %s325
        // Predicated region
        $region53: #{tpu_custom_call.1} parent=43 // pred_check
          %p327 = pneg %p107
        $region54: #{tpu_custom_call.1} parent=43 // pred_check_branch
          %329 = sbr.rel (%p327) target = $region56
        $region55: #{tpu_custom_call.1} parent=43 // pred_region
          %330 = dma.done %s323, 1024
        $region56: #{tpu_custom_call.1} parent=43 // pred_fallthru
          _
        // Predicated region
        $region57: #{tpu_custom_call.1} parent=43 // pred_check
          %p331 = pneg %p128
        $region58: #{tpu_custom_call.1} parent=43 // pred_check_branch
          %333 = sbr.rel (%p331) target = $region60
        $region59: #{tpu_custom_call.1} parent=43 // pred_region
          %334 = dma.done [#allocation7], 2048
        $region60: #{tpu_custom_call.1} parent=43 // pred_fallthru
          _
        // Predicated region
        $region61: #{tpu_custom_call.1} parent=43 // pred_check
          %p335 = pneg %p149
        $region62: #{tpu_custom_call.1} parent=43 // pred_check_branch
          %337 = sbr.rel (%p335) target = $region64
        $region63: #{tpu_custom_call.1} parent=43 // pred_region
          %338 = dma.done [#allocation11], 2048
        $region64: #{tpu_custom_call.1} parent=43 // pred_fallthru
          _
        %s339 = sand.u32 %s25, 1
        %s340 = scalar_lea.sflag [#allocation4], %s339
        %s341 = sand.u32 %s47, 1
        %s342 = smul.addr %s341, 128
        %s343 = scalar_lea.vmem [#allocation3], %s342
        %p344 = pneg %p60
        %p345 = pneg %p57
        %p346 = pneg %p81
        %p347 = pneg %p78
        %s348 = sand.u32 %s25, 1
        %s349 = scalar_lea.sflag [#allocation4], %s348
        %s350 = sand.u32 %s94, 1
        %s351 = smul.addr %s350, 64
        %s352 = scalar_lea.vmem [#allocation8], %s351
        %p353 = pneg %p107
        %p354 = pneg %p104
        %p355 = pneg %p128
        %p356 = pneg %p125
        %p357 = pneg %p149
        %p358 = pneg %p146
        %p359 = pneg %p170
        %p360 = pneg %p167
        %p361 = pneg %p196
        %p362 = pneg %p193
        %s363 = sand.u32 %s183, 1
        %s364 = scalar_lea.sflag [#allocation5], %s363
        %s365 = sand.u32 %s183, 1
        %s366 = smul.addr %s365, 64
        %s367 = scalar_lea.vmem [#allocation12], %s366
        %s368 = smul.u32 16, %s29
        %s369 = smul.u32 2, %s30
        %s370 = smul.u32 16, %s29
        %s371 = smul.u32 16, %s29
        %p373 = scmp.eq.s32.totalorder %s30, 0
        // Predicated region
        $region65: #{tpu_custom_call.1} parent=43 // pred_check
          %p374 = pneg %p373
        $region66: #{tpu_custom_call.1} parent=43 // pred_check_branch
          %376 = sbr.rel (%p374) target = $region68
        $region67: #{tpu_custom_call.1} parent=43 // pred_region
          %377 = vst [vmem:[#allocation2] sm:$0xff] 0.0
          %378 = vst [vmem:[#allocation2 + $0x8] sm:$0xff] 0.0
          %379 = vst [vmem:[#allocation2 + $0x10] sm:$0xff] 0.0
          %380 = vst [vmem:[#allocation2 + $0x18] sm:$0xff] 0.0
          %381 = vst [vmem:[#allocation2 + $0x20] sm:$0xff] 0.0
          %382 = vst [vmem:[#allocation2 + $0x28] sm:$0xff] 0.0
          %383 = vst [vmem:[#allocation2 + $0x30] sm:$0xff] 0.0
          %384 = vst [vmem:[#allocation2 + $0x38] sm:$0xff] 0.0
          %385 = vst [vmem:[#allocation2 + $0x40] sm:$0xff] 0.0
          %386 = vst [vmem:[#allocation2 + $0x48] sm:$0xff] 0.0
          %387 = vst [vmem:[#allocation2 + $0x50] sm:$0xff] 0.0
          %388 = vst [vmem:[#allocation2 + $0x58] sm:$0xff] 0.0
          %389 = vst [vmem:[#allocation2 + $0x60] sm:$0xff] 0.0
          %390 = vst [vmem:[#allocation2 + $0x68] sm:$0xff] 0.0
          %391 = vst [vmem:[#allocation2 + $0x70] sm:$0xff] 0.0
          %392 = vst [vmem:[#allocation2 + $0x78] sm:$0xff] 0.0
        $region68: #{tpu_custom_call.1} parent=43 // pred_fallthru
          _
        %s393 = smul.u32 %s30, 256
        %s394 = sshra.s32 %s393, 3
        %s395 = sand.u32 %s393, 7
        %s396 = smul.addr %s394, 4
        %s397 = scalar_lea.vmem [#allocation6], %s396
        %v398 = vld [vmem:[%s397] sm:$0xf]
        %v399 = vld [vmem:[%s397 + $0x4] sm:$0xf]
        %v400 = vld [vmem:[%s397 + $0x8] sm:$0xf]
        %v401 = vld [vmem:[%s397 + $0xc] sm:$0xf]
        %v402 = vld [vmem:[%s397 + $0x10] sm:$0xf]
        %v403 = vld [vmem:[%s397 + $0x14] sm:$0xf]
        %v404 = vld [vmem:[%s397 + $0x18] sm:$0xf]
        %v405 = vld [vmem:[%s397 + $0x1c] sm:$0xf]
        %v406 = vld [vmem:[%s397 + $0x20] sm:$0xf]
        %v407 = vld [vmem:[%s397 + $0x24] sm:$0xf]
        %v408 = vld [vmem:[%s397 + $0x28] sm:$0xf]
        %v409 = vld [vmem:[%s397 + $0x2c] sm:$0xf]
        %v410 = vld [vmem:[%s397 + $0x30] sm:$0xf]
        %v411 = vld [vmem:[%s397 + $0x34] sm:$0xf]
        %v412 = vld [vmem:[%s397 + $0x38] sm:$0xf]
        %v413 = vld [vmem:[%s397 + $0x3c] sm:$0xf]
        %v414 = vld [vmem:[%s397 + $0x40] sm:$0xf]
        %v415 = vld [vmem:[%s397 + $0x44] sm:$0xf]
        %v416 = vld [vmem:[%s397 + $0x48] sm:$0xf]
        %v417 = vld [vmem:[%s397 + $0x4c] sm:$0xf]
        %v418 = vld [vmem:[%s397 + $0x50] sm:$0xf]
        %v419 = vld [vmem:[%s397 + $0x54] sm:$0xf]
        %v420 = vld [vmem:[%s397 + $0x58] sm:$0xf]
        %v421 = vld [vmem:[%s397 + $0x5c] sm:$0xf]
        %v422 = vld [vmem:[%s397 + $0x60] sm:$0xf]
        %v423 = vld [vmem:[%s397 + $0x64] sm:$0xf]
        %v424 = vld [vmem:[%s397 + $0x68] sm:$0xf]
        %v425 = vld [vmem:[%s397 + $0x6c] sm:$0xf]
        %v426 = vld [vmem:[%s397 + $0x70] sm:$0xf]
        %v427 = vld [vmem:[%s397 + $0x74] sm:$0xf]
        %v428 = vld [vmem:[%s397 + $0x78] sm:$0xf]
        %v429 = vld [vmem:[%s397 + $0x7c] sm:$0xf]
        %v430 = vld [vmem:[#allocation2] sm:$0xff]
        %v431 = vld [vmem:[#allocation2 + $0x8] sm:$0xff]
        %v432 = vld [vmem:[#allocation2 + $0x10] sm:$0xff]
        %v433 = vld [vmem:[#allocation2 + $0x18] sm:$0xff]
        %v434 = vld [vmem:[#allocation2 + $0x20] sm:$0xff]
        %v435 = vld [vmem:[#allocation2 + $0x28] sm:$0xff]
        %v436 = vld [vmem:[#allocation2 + $0x30] sm:$0xff]
        %v437 = vld [vmem:[#allocation2 + $0x38] sm:$0xff]
        %v438 = vld [vmem:[#allocation2 + $0x40] sm:$0xff]
        %v439 = vld [vmem:[#allocation2 + $0x48] sm:$0xff]
        %v440 = vld [vmem:[#allocation2 + $0x50] sm:$0xff]
        %v441 = vld [vmem:[#allocation2 + $0x58] sm:$0xff]
        %v442 = vld [vmem:[#allocation2 + $0x60] sm:$0xff]
        %v443 = vld [vmem:[#allocation2 + $0x68] sm:$0xff]
        %v444 = vld [vmem:[#allocation2 + $0x70] sm:$0xff]
        %v445 = vld [vmem:[#allocation2 + $0x78] sm:$0xff]
        %v446 = vld [vmem:[%s313] sm:$0xff]
        %v447 = vld [vmem:[%s313 + $0x8] sm:$0xff]
        %v448 = vld [vmem:[%s313 + $0x10] sm:$0xff]
        %v449 = vld [vmem:[%s313 + $0x18] sm:$0xff]
        %v450 = vld [vmem:[%s313 + $0x20] sm:$0xff]
        %v451 = vld [vmem:[%s313 + $0x28] sm:$0xff]
        %v452 = vld [vmem:[%s313 + $0x30] sm:$0xff]
        %v453 = vld [vmem:[%s313 + $0x38] sm:$0xff]
        %v454 = vld [vmem:[%s313 + $0x40] sm:$0xff]
        %v455 = vld [vmem:[%s313 + $0x48] sm:$0xff]
        %v456 = vld [vmem:[%s313 + $0x50] sm:$0xff]
        %v457 = vld [vmem:[%s313 + $0x58] sm:$0xff]
        %v458 = vld [vmem:[%s313 + $0x60] sm:$0xff]
        %v459 = vld [vmem:[%s313 + $0x68] sm:$0xff]
        %v460 = vld [vmem:[%s313 + $0x70] sm:$0xff]
        %v461 = vld [vmem:[%s313 + $0x78] sm:$0xff]
        %v478 = vunpack.c.l.b16 %v446
        %v479 = vunpack.c.h.b16 %v446
        %v480 = vunpack.c.l.b16 %v447
        %v481 = vunpack.c.h.b16 %v447
        %v482 = vunpack.c.l.b16 %v448
        %v483 = vunpack.c.h.b16 %v448
        %v484 = vunpack.c.l.b16 %v449
        %v485 = vunpack.c.h.b16 %v449
        %v486 = vunpack.c.l.b16 %v450
        %v487 = vunpack.c.h.b16 %v450
        %v488 = vunpack.c.l.b16 %v451
        %v489 = vunpack.c.h.b16 %v451
        %v490 = vunpack.c.l.b16 %v452
        %v491 = vunpack.c.h.b16 %v452
        %v492 = vunpack.c.l.b16 %v453
        %v493 = vunpack.c.h.b16 %v453
        %v494 = vunpack.c.l.b16 %v454
        %v495 = vunpack.c.h.b16 %v454
        %v496 = vunpack.c.l.b16 %v455
        %v497 = vunpack.c.h.b16 %v455
        %v498 = vunpack.c.l.b16 %v456
        %v499 = vunpack.c.h.b16 %v456
        %v500 = vunpack.c.l.b16 %v457
        %v501 = vunpack.c.h.b16 %v457
        %v502 = vunpack.c.l.b16 %v458
        %v503 = vunpack.c.h.b16 %v458
        %v504 = vunpack.c.l.b16 %v459
        %v505 = vunpack.c.h.b16 %v459
        %v506 = vunpack.c.l.b16 %v460
        %v507 = vunpack.c.h.b16 %v460
        %v508 = vunpack.c.l.b16 %v461
        %v509 = vunpack.c.h.b16 %v461
        %v510 = vpack.c.b16 %v480, %v478
        %v511 = vpack.c.b16 %v481, %v479
        %v512 = vpack.c.b16 %v484, %v482
        %v513 = vpack.c.b16 %v485, %v483
        %v514 = vpack.c.b16 %v488, %v486
        %v515 = vpack.c.b16 %v489, %v487
        %v516 = vpack.c.b16 %v492, %v490
        %v517 = vpack.c.b16 %v493, %v491
        %v518 = vpack.c.b16 %v496, %v494
        %v519 = vpack.c.b16 %v497, %v495
        %v520 = vpack.c.b16 %v500, %v498
        %v521 = vpack.c.b16 %v501, %v499
        %v522 = vpack.c.b16 %v504, %v502
        %v523 = vpack.c.b16 %v505, %v503
        %v524 = vpack.c.b16 %v508, %v506
        %v525 = vpack.c.b16 %v509, %v507
        %v574 = vunpack.c.l.b16 %v398
        %v575 = vunpack.c.l.b16 %v399
        %v576 = vunpack.c.l.b16 %v400
        %v577 = vunpack.c.l.b16 %v401
        %v578 = vunpack.c.l.b16 %v402
        %v579 = vunpack.c.l.b16 %v403
        %v580 = vunpack.c.l.b16 %v404
        %v581 = vunpack.c.l.b16 %v405
        %v582 = vunpack.c.l.b16 %v406
        %v583 = vunpack.c.l.b16 %v407
        %v584 = vunpack.c.l.b16 %v408
        %v585 = vunpack.c.l.b16 %v409
        %v586 = vunpack.c.l.b16 %v410
        %v587 = vunpack.c.l.b16 %v411
        %v588 = vunpack.c.l.b16 %v412
        %v589 = vunpack.c.l.b16 %v413
        %v590 = vunpack.c.l.b16 %v414
        %v591 = vunpack.c.l.b16 %v415
        %v592 = vunpack.c.l.b16 %v416
        %v593 = vunpack.c.l.b16 %v417
        %v594 = vunpack.c.l.b16 %v418
        %v595 = vunpack.c.l.b16 %v419
        %v596 = vunpack.c.l.b16 %v420
        %v597 = vunpack.c.l.b16 %v421
        %v598 = vunpack.c.l.b16 %v422
        %v599 = vunpack.c.l.b16 %v423
        %v600 = vunpack.c.l.b16 %v424
        %v601 = vunpack.c.l.b16 %v425
        %v602 = vunpack.c.l.b16 %v426
        %v603 = vunpack.c.l.b16 %v427
        %v604 = vunpack.c.l.b16 %v428
        %v605 = vunpack.c.l.b16 %v429
        %v606 = vpack.c.b16 %v575, %v574
        %v607 = vpack.c.b16 %v577, %v576
        %v608 = vpack.c.b16 %v579, %v578
        %v609 = vpack.c.b16 %v581, %v580
        %v610 = vpack.c.b16 %v583, %v582
        %v611 = vpack.c.b16 %v585, %v584
        %v612 = vpack.c.b16 %v587, %v586
        %v613 = vpack.c.b16 %v589, %v588
        %v614 = vpack.c.b16 %v591, %v590
        %v615 = vpack.c.b16 %v593, %v592
        %v616 = vpack.c.b16 %v595, %v594
        %v617 = vpack.c.b16 %v597, %v596
        %v618 = vpack.c.b16 %v599, %v598
        %v619 = vpack.c.b16 %v601, %v600
        %v620 = vpack.c.b16 %v603, %v602
        %v621 = vpack.c.b16 %v605, %v604
        %638 = vmatprep.subr.bf16.mxu0 0
        %639 = vmatpush1.bf16.msra.mxu0 %v613
        %640 = vmatprep.subr.bf16.mxu0 0
        %641 = vmatpush1.bf16.msra.mxu0 %v612
        %642 = vmatprep.subr.bf16.mxu0 0
        %643 = vmatpush1.bf16.msra.mxu0 %v611
        %644 = vmatprep.subr.bf16.mxu0 0
        %645 = vmatpush1.bf16.msra.mxu0 %v610
        %646 = vmatprep.subr.bf16.mxu0 0
        %647 = vmatpush1.bf16.msra.mxu0 %v609
        %648 = vmatprep.subr.bf16.mxu0 0
        %649 = vmatpush1.bf16.msra.mxu0 %v608
        %650 = vmatprep.subr.bf16.mxu0 0
        %651 = vmatpush1.bf16.msra.mxu0 %v607
        %652 = vmatprep.subr.bf16.mxu0 0
        %653 = vmatpush1.bf16.msra.mxu0 %v606
        %654 = vmatprep.subr.bf16.mxu0 0
        %655 = vmatpush2.bf16.msra.mxu0 %v621
        %656 = vmatprep.subr.bf16.mxu0 0
        %657 = vmatpush2.bf16.msra.mxu0 %v620
        %658 = vmatprep.subr.bf16.mxu0 0
        %659 = vmatpush2.bf16.msra.mxu0 %v619
        %660 = vmatprep.subr.bf16.mxu0 0
        %661 = vmatpush2.bf16.msra.mxu0 %v618
        %662 = vmatprep.subr.bf16.mxu0 0
        %663 = vmatpush2.bf16.msra.mxu0 %v617
        %664 = vmatprep.subr.bf16.mxu0 0
        %665 = vmatpush2.bf16.msra.mxu0 %v616
        %666 = vmatprep.subr.bf16.mxu0 0
        %667 = vmatpush2.bf16.msra.mxu0 %v615
        %668 = vmatprep.subr.bf16.mxu0 0
        %669 = vmatpush2.bf16.msra.mxu0 %v614
        %670 = vmatprep.mubr.bf16.mxu0 %v511
        %671 = vmatmul.mubr.bf16.gmra.mxu0 %v510
        %v672 = vpop.f32.mrf.mxu0
        %v673 = vadd.f32 0.0, %v672
        %v674 = vpop.f32.mrf.mxu0
        %v675 = vpop.f32.mrf.mxu0
        %v676 = vadd.f32 0.0, %v675
        %v677 = vpop.f32.mrf.mxu0
        %678 = vmatprep.mubr.bf16.mxu0 %v513
        %679 = vmatmul.mubr.bf16.gmra.mxu0 %v512
        %v680 = vpop.f32.mrf.mxu0
        %v681 = vadd.f32 0.0, %v680
        %v682 = vpop.f32.mrf.mxu0
        %v683 = vpop.f32.mrf.mxu0
        %v684 = vadd.f32 0.0, %v683
        %v685 = vpop.f32.mrf.mxu0
        %686 = vmatprep.mubr.bf16.mxu0 %v515
        %687 = vmatmul.mubr.bf16.gmra.mxu0 %v514
        %v688 = vpop.f32.mrf.mxu0
        %v689 = vadd.f32 0.0, %v688
        %v690 = vpop.f32.mrf.mxu0
        %v691 = vpop.f32.mrf.mxu0
        %v692 = vadd.f32 0.0, %v691
        %v693 = vpop.f32.mrf.mxu0
        %694 = vmatprep.mubr.bf16.mxu0 %v517
        %695 = vmatmul.mubr.bf16.gmra.mxu0 %v516
        %v696 = vpop.f32.mrf.mxu0
        %v697 = vadd.f32 0.0, %v696
        %v698 = vpop.f32.mrf.mxu0
        %v699 = vpop.f32.mrf.mxu0
        %v700 = vadd.f32 0.0, %v699
        %v701 = vpop.f32.mrf.mxu0
        %702 = vmatprep.mubr.bf16.mxu0 %v519
        %703 = vmatmul.mubr.bf16.gmra.mxu0 %v518
        %v704 = vpop.f32.mrf.mxu0
        %v705 = vadd.f32 0.0, %v704
        %v706 = vpop.f32.mrf.mxu0
        %v707 = vpop.f32.mrf.mxu0
        %v708 = vadd.f32 0.0, %v707
        %v709 = vpop.f32.mrf.mxu0
        %710 = vmatprep.mubr.bf16.mxu0 %v521
        %711 = vmatmul.mubr.bf16.gmra.mxu0 %v520
        %v712 = vpop.f32.mrf.mxu0
        %v713 = vadd.f32 0.0, %v712
        %v714 = vpop.f32.mrf.mxu0
        %v715 = vpop.f32.mrf.mxu0
        %v716 = vadd.f32 0.0, %v715
        %v717 = vpop.f32.mrf.mxu0
        %718 = vmatprep.mubr.bf16.mxu0 %v523
        %719 = vmatmul.mubr.bf16.gmra.mxu0 %v522
        %v720 = vpop.f32.mrf.mxu0
        %v721 = vadd.f32 0.0, %v720
        %v722 = vpop.f32.mrf.mxu0
        %v723 = vpop.f32.mrf.mxu0
        %v724 = vadd.f32 0.0, %v723
        %v725 = vpop.f32.mrf.mxu0
        %726 = vmatprep.mubr.bf16.mxu0 %v525
        %727 = vmatmul.mubr.bf16.gmra.mxu0 %v524
        %v728 = vpop.f32.mrf.mxu0
        %v729 = vadd.f32 0.0, %v728
        %v730 = vpop.f32.mrf.mxu0
        %v731 = vpop.f32.mrf.mxu0
        %v732 = vadd.f32 0.0, %v731
        %v733 = vpop.f32.mrf.mxu0
        %734 = vdwg.mxu0
        %v735 = vadd.f32 %v430, %v673
        %v736 = vadd.f32 %v431, %v676
        %v737 = vadd.f32 %v432, %v681
        %v738 = vadd.f32 %v433, %v684
        %v739 = vadd.f32 %v434, %v689
        %v740 = vadd.f32 %v435, %v692
        %v741 = vadd.f32 %v436, %v697
        %v742 = vadd.f32 %v437, %v700
        %v743 = vadd.f32 %v438, %v705
        %v744 = vadd.f32 %v439, %v708
        %v745 = vadd.f32 %v440, %v713
        %v746 = vadd.f32 %v441, %v716
        %v747 = vadd.f32 %v442, %v721
        %v748 = vadd.f32 %v443, %v724
        %v749 = vadd.f32 %v444, %v729
        %v750 = vadd.f32 %v445, %v732
        %751 = vst [vmem:[#allocation2] sm:$0xff] %v735
        %752 = vst [vmem:[#allocation2 + $0x8] sm:$0xff] %v736
        %753 = vst [vmem:[#allocation2 + $0x10] sm:$0xff] %v737
        %754 = vst [vmem:[#allocation2 + $0x18] sm:$0xff] %v738
        %755 = vst [vmem:[#allocation2 + $0x20] sm:$0xff] %v739
        %756 = vst [vmem:[#allocation2 + $0x28] sm:$0xff] %v740
        %757 = vst [vmem:[#allocation2 + $0x30] sm:$0xff] %v741
        %758 = vst [vmem:[#allocation2 + $0x38] sm:$0xff] %v742
        %759 = vst [vmem:[#allocation2 + $0x40] sm:$0xff] %v743
        %760 = vst [vmem:[#allocation2 + $0x48] sm:$0xff] %v744
        %761 = vst [vmem:[#allocation2 + $0x50] sm:$0xff] %v745
        %762 = vst [vmem:[#allocation2 + $0x58] sm:$0xff] %v746
        %763 = vst [vmem:[#allocation2 + $0x60] sm:$0xff] %v747
        %764 = vst [vmem:[#allocation2 + $0x68] sm:$0xff] %v748
        %765 = vst [vmem:[#allocation2 + $0x70] sm:$0xff] %v749
        %766 = vst [vmem:[#allocation2 + $0x78] sm:$0xff] %v750
        // Predicated region
        $region69: #{tpu_custom_call.1} parent=43 // pred_check
          %p767 = pneg %p373
        $region70: #{tpu_custom_call.1} parent=43 // pred_check_branch
          %769 = sbr.rel (%p767) target = $region72
        $region71: #{tpu_custom_call.1} parent=43 // pred_region
          %v770 = vld [vmem:[#allocation2] sm:$0xff]
          %v771 = vld [vmem:[#allocation2 + $0x8] sm:$0xff]
          %v772 = vld [vmem:[#allocation2 + $0x10] sm:$0xff]
          %v773 = vld [vmem:[#allocation2 + $0x18] sm:$0xff]
          %v774 = vld [vmem:[#allocation2 + $0x20] sm:$0xff]
          %v775 = vld [vmem:[#allocation2 + $0x28] sm:$0xff]
          %v776 = vld [vmem:[#allocation2 + $0x30] sm:$0xff]
          %v777 = vld [vmem:[#allocation2 + $0x38] sm:$0xff]
          %v778 = vld [vmem:[#allocation2 + $0x40] sm:$0xff]
          %v779 = vld [vmem:[#allocation2 + $0x48] sm:$0xff]
          %v780 = vld [vmem:[#allocation2 + $0x50] sm:$0xff]
          %v781 = vld [vmem:[#allocation2 + $0x58] sm:$0xff]
          %v782 = vld [vmem:[#allocation2 + $0x60] sm:$0xff]
          %v783 = vld [vmem:[#allocation2 + $0x68] sm:$0xff]
          %v784 = vld [vmem:[#allocation2 + $0x70] sm:$0xff]
          %v785 = vld [vmem:[#allocation2 + $0x78] sm:$0xff]
          %v786 = vld [vmem:[#allocation9] sm:$0xff]
          %v787 = vld [vmem:[#allocation9 + $0x8] sm:$0xff]
          %v788 = vld [vmem:[#allocation9 + $0x10] sm:$0xff]
          %v789 = vld [vmem:[#allocation9 + $0x18] sm:$0xff]
          %v790 = vld [vmem:[#allocation9 + $0x20] sm:$0xff]
          %v791 = vld [vmem:[#allocation9 + $0x28] sm:$0xff]
          %v792 = vld [vmem:[#allocation9 + $0x30] sm:$0xff]
          %v793 = vld [vmem:[#allocation9 + $0x38] sm:$0xff]
          %v794 = vld [vmem:[#allocation9 + $0x40] sm:$0xff]
          %v795 = vld [vmem:[#allocation9 + $0x48] sm:$0xff]
          %v796 = vld [vmem:[#allocation9 + $0x50] sm:$0xff]
          %v797 = vld [vmem:[#allocation9 + $0x58] sm:$0xff]
          %v798 = vld [vmem:[#allocation9 + $0x60] sm:$0xff]
          %v799 = vld [vmem:[#allocation9 + $0x68] sm:$0xff]
          %v800 = vld [vmem:[#allocation9 + $0x70] sm:$0xff]
          %v801 = vld [vmem:[#allocation9 + $0x78] sm:$0xff]
          %v802 = vld [vmem:[%s326] sm:$0xf]
          %v803 = vld [vmem:[%s326 + $0x4] sm:$0xf]
          %v804 = vld [vmem:[%s326 + $0x8] sm:$0xf]
          %v805 = vld [vmem:[%s326 + $0xc] sm:$0xf]
          %v806 = vld [vmem:[%s326 + $0x10] sm:$0xf]
          %v807 = vld [vmem:[%s326 + $0x14] sm:$0xf]
          %v808 = vld [vmem:[%s326 + $0x18] sm:$0xf]
          %v809 = vld [vmem:[%s326 + $0x1c] sm:$0xf]
          %v810 = vld [vmem:[%s326 + $0x20] sm:$0xf]
          %v811 = vld [vmem:[%s326 + $0x24] sm:$0xf]
          %v812 = vld [vmem:[%s326 + $0x28] sm:$0xf]
          %v813 = vld [vmem:[%s326 + $0x2c] sm:$0xf]
          %v814 = vld [vmem:[%s326 + $0x30] sm:$0xf]
          %v815 = vld [vmem:[%s326 + $0x34] sm:$0xf]
          %v816 = vld [vmem:[%s326 + $0x38] sm:$0xf]
          %v817 = vld [vmem:[%s326 + $0x3c] sm:$0xf]
          %v818 = vunpack.c.l.bf16 %v802
          %v819 = vunpack.c.l.bf16 %v803
          %v820 = vunpack.c.l.bf16 %v804
          %v821 = vunpack.c.l.bf16 %v805
          %v822 = vunpack.c.l.bf16 %v806
          %v823 = vunpack.c.l.bf16 %v807
          %v824 = vunpack.c.l.bf16 %v808
          %v825 = vunpack.c.l.bf16 %v809
          %v826 = vunpack.c.l.bf16 %v810
          %v827 = vunpack.c.l.bf16 %v811
          %v828 = vunpack.c.l.bf16 %v812
          %v829 = vunpack.c.l.bf16 %v813
          %v830 = vunpack.c.l.bf16 %v814
          %v831 = vunpack.c.l.bf16 %v815
          %v832 = vunpack.c.l.bf16 %v816
          %v833 = vunpack.c.l.bf16 %v817
          %v834 = vld [vmem:[#allocation10] sm:$0xff]
          %v835 = vld [vmem:[#allocation10 + $0x8] sm:$0xff]
          %v836 = vld [vmem:[#allocation10 + $0x10] sm:$0xff]
          %v837 = vld [vmem:[#allocation10 + $0x18] sm:$0xff]
          %v838 = vld [vmem:[#allocation10 + $0x20] sm:$0xff]
          %v839 = vld [vmem:[#allocation10 + $0x28] sm:$0xff]
          %v840 = vld [vmem:[#allocation10 + $0x30] sm:$0xff]
          %v841 = vld [vmem:[#allocation10 + $0x38] sm:$0xff]
          %v842 = vld [vmem:[#allocation10 + $0x40] sm:$0xff]
          %v843 = vld [vmem:[#allocation10 + $0x48] sm:$0xff]
          %v844 = vld [vmem:[#allocation10 + $0x50] sm:$0xff]
          %v845 = vld [vmem:[#allocation10 + $0x58] sm:$0xff]
          %v846 = vld [vmem:[#allocation10 + $0x60] sm:$0xff]
          %v847 = vld [vmem:[#allocation10 + $0x68] sm:$0xff]
          %v848 = vld [vmem:[#allocation10 + $0x70] sm:$0xff]
          %v849 = vld [vmem:[#allocation10 + $0x78] sm:$0xff]
          %850 = vmatprep.subr.mxu0 0.0
          %851 = vmatpush1.msra.mxu0 %v849
          %852 = vmatprep.subr.mxu0 0.0
          %853 = vmatpush1.msra.mxu0 %v848
          %854 = vmatprep.subr.mxu0 0.0
          %855 = vmatpush1.msra.mxu0 %v847
          %856 = vmatprep.subr.mxu0 0.0
          %857 = vmatpush1.msra.mxu0 %v846
          %858 = vmatprep.subr.mxu0 0.0
          %859 = vmatpush1.msra.mxu0 %v845
          %860 = vmatprep.subr.mxu0 0.0
          %861 = vmatpush1.msra.mxu0 %v844
          %862 = vmatprep.subr.mxu0 0.0
          %863 = vmatpush1.msra.mxu0 %v843
          %864 = vmatprep.subr.mxu0 0.0
          %865 = vmatpush1.msra.mxu0 %v842
          %866 = vmatprep.subr.mxu0 0.0
          %867 = vmatpush1.msra.mxu0 %v841
          %868 = vmatprep.subr.mxu0 0.0
          %869 = vmatpush1.msra.mxu0 %v840
          %870 = vmatprep.subr.mxu0 0.0
          %871 = vmatpush1.msra.mxu0 %v839
          %872 = vmatprep.subr.mxu0 0.0
          %873 = vmatpush1.msra.mxu0 %v838
          %874 = vmatprep.subr.mxu0 0.0
          %875 = vmatpush1.msra.mxu0 %v837
          %876 = vmatprep.subr.mxu0 0.0
          %877 = vmatpush1.msra.mxu0 %v836
          %878 = vmatprep.subr.mxu0 0.0
          %879 = vmatpush1.msra.mxu0 %v835
          %880 = vmatprep.subr.mxu0 0.0
          %881 = vmatpush1.msra.mxu0 %v834
          %882 = vmatprep.subr.mxu0 0.0
          %883 = vmatpush2.msra.mxu0 0.0
          %884 = vmatprep.subr.mxu0 0.0
          %885 = vmatpush2.msra.mxu0 0.0
          %886 = vmatprep.subr.mxu0 0.0
          %887 = vmatpush2.msra.mxu0 0.0
          %888 = vmatprep.subr.mxu0 0.0
          %889 = vmatpush2.msra.mxu0 0.0
          %890 = vmatprep.subr.mxu0 0.0
          %891 = vmatpush2.msra.mxu0 0.0
          %892 = vmatprep.subr.mxu0 0.0
          %893 = vmatpush2.msra.mxu0 0.0
          %894 = vmatprep.subr.mxu0 0.0
          %895 = vmatpush2.msra.mxu0 0.0
          %896 = vmatprep.subr.mxu0 0.0
          %897 = vmatpush2.msra.mxu0 0.0
          %898 = vmatprep.subr.mxu0 0.0
          %899 = vmatpush2.msra.mxu0 0.0
          %900 = vmatprep.subr.mxu0 0.0
          %901 = vmatpush2.msra.mxu0 0.0
          %902 = vmatprep.subr.mxu0 0.0
          %903 = vmatpush2.msra.mxu0 0.0
          %904 = vmatprep.subr.mxu0 0.0
          %905 = vmatpush2.msra.mxu0 0.0
          %906 = vmatprep.subr.mxu0 0.0
          %907 = vmatpush2.msra.mxu0 0.0
          %908 = vmatprep.subr.mxu0 0.0
          %909 = vmatpush2.msra.mxu0 0.0
          %910 = vmatprep.subr.mxu0 0.0
          %911 = vmatpush2.msra.mxu0 0.0
          %912 = vmatprep.subr.mxu0 0.0
          %913 = vmatpush2.msra.mxu0 0.0
          %914 = vmatprep.mubr.f32.mxu0 0.0
          %915 = vmatmul.mubr.f32.gmra.mxu0 %v818
          %v916 = vpop.f32.mrf.mxu0
          %v917 = vadd.f32 0.0, %v916
          %v918 = vpop.f32.mrf.mxu0
          %919 = vmatprep.mubr.f32.mxu0 0.0
          %920 = vmatmul.mubr.f32.gmra.mxu0 %v819
          %v921 = vpop.f32.mrf.mxu0
          %v922 = vadd.f32 0.0, %v921
          %v923 = vpop.f32.mrf.mxu0
          %924 = vmatprep.mubr.f32.mxu0 0.0
          %925 = vmatmul.mubr.f32.gmra.mxu0 %v820
          %v926 = vpop.f32.mrf.mxu0
          %v927 = vadd.f32 0.0, %v926
          %v928 = vpop.f32.mrf.mxu0
          %929 = vmatprep.mubr.f32.mxu0 0.0
          %930 = vmatmul.mubr.f32.gmra.mxu0 %v821
          %v931 = vpop.f32.mrf.mxu0
          %v932 = vadd.f32 0.0, %v931
          %v933 = vpop.f32.mrf.mxu0
          %934 = vmatprep.mubr.f32.mxu0 0.0
          %935 = vmatmul.mubr.f32.gmra.mxu0 %v822
          %v936 = vpop.f32.mrf.mxu0
          %v937 = vadd.f32 0.0, %v936
          %v938 = vpop.f32.mrf.mxu0
          %939 = vmatprep.mubr.f32.mxu0 0.0
          %940 = vmatmul.mubr.f32.gmra.mxu0 %v823
          %v941 = vpop.f32.mrf.mxu0
          %v942 = vadd.f32 0.0, %v941
          %v943 = vpop.f32.mrf.mxu0
          %944 = vmatprep.mubr.f32.mxu0 0.0
          %945 = vmatmul.mubr.f32.gmra.mxu0 %v824
          %v946 = vpop.f32.mrf.mxu0
          %v947 = vadd.f32 0.0, %v946
          %v948 = vpop.f32.mrf.mxu0
          %949 = vmatprep.mubr.f32.mxu0 0.0
          %950 = vmatmul.mubr.f32.gmra.mxu0 %v825
          %v951 = vpop.f32.mrf.mxu0
          %v952 = vadd.f32 0.0, %v951
          %v953 = vpop.f32.mrf.mxu0
          %954 = vmatprep.mubr.f32.mxu0 0.0
          %955 = vmatmul.mubr.f32.gmra.mxu0 %v826
          %v956 = vpop.f32.mrf.mxu0
          %v957 = vadd.f32 0.0, %v956
          %v958 = vpop.f32.mrf.mxu0
          %959 = vmatprep.mubr.f32.mxu0 0.0
          %960 = vmatmul.mubr.f32.gmra.mxu0 %v827
          %v961 = vpop.f32.mrf.mxu0
          %v962 = vadd.f32 0.0, %v961
          %v963 = vpop.f32.mrf.mxu0
          %964 = vmatprep.mubr.f32.mxu0 0.0
          %965 = vmatmul.mubr.f32.gmra.mxu0 %v828
          %v966 = vpop.f32.mrf.mxu0
          %v967 = vadd.f32 0.0, %v966
          %v968 = vpop.f32.mrf.mxu0
          %969 = vmatprep.mubr.f32.mxu0 0.0
          %970 = vmatmul.mubr.f32.gmra.mxu0 %v829
          %v971 = vpop.f32.mrf.mxu0
          %v972 = vadd.f32 0.0, %v971
          %v973 = vpop.f32.mrf.mxu0
          %974 = vmatprep.mubr.f32.mxu0 0.0
          %975 = vmatmul.mubr.f32.gmra.mxu0 %v830
          %v976 = vpop.f32.mrf.mxu0
          %v977 = vadd.f32 0.0, %v976
          %v978 = vpop.f32.mrf.mxu0
          %979 = vmatprep.mubr.f32.mxu0 0.0
          %980 = vmatmul.mubr.f32.gmra.mxu0 %v831
          %v981 = vpop.f32.mrf.mxu0
          %v982 = vadd.f32 0.0, %v981
          %v983 = vpop.f32.mrf.mxu0
          %984 = vmatprep.mubr.f32.mxu0 0.0
          %985 = vmatmul.mubr.f32.gmra.mxu0 %v832
          %v986 = vpop.f32.mrf.mxu0
          %v987 = vadd.f32 0.0, %v986
          %v988 = vpop.f32.mrf.mxu0
          %989 = vmatprep.mubr.f32.mxu0 0.0
          %990 = vmatmul.mubr.f32.gmra.mxu0 %v833
          %v991 = vpop.f32.mrf.mxu0
          %v992 = vadd.f32 0.0, %v991
          %v993 = vpop.f32.mrf.mxu0
          %994 = vdwg.mxu0
          %995 = vmatprep.subr.mxu0 0.0
          %996 = vmatpush1.msra.mxu0 %v801
          %997 = vmatprep.subr.mxu0 0.0
          %998 = vmatpush1.msra.mxu0 %v800
          %999 = vmatprep.subr.mxu0 0.0
          %1000 = vmatpush1.msra.mxu0 %v799
          %1001 = vmatprep.subr.mxu0 0.0
          %1002 = vmatpush1.msra.mxu0 %v798
          %1003 = vmatprep.subr.mxu0 0.0
          %1004 = vmatpush1.msra.mxu0 %v797
          %1005 = vmatprep.subr.mxu0 0.0
          %1006 = vmatpush1.msra.mxu0 %v796
          %1007 = vmatprep.subr.mxu0 0.0
          %1008 = vmatpush1.msra.mxu0 %v795
          %1009 = vmatprep.subr.mxu0 0.0
          %1010 = vmatpush1.msra.mxu0 %v794
          %1011 = vmatprep.subr.mxu0 0.0
          %1012 = vmatpush1.msra.mxu0 %v793
          %1013 = vmatprep.subr.mxu0 0.0
          %1014 = vmatpush1.msra.mxu0 %v792
          %1015 = vmatprep.subr.mxu0 0.0
          %1016 = vmatpush1.msra.mxu0 %v791
          %1017 = vmatprep.subr.mxu0 0.0
          %1018 = vmatpush1.msra.mxu0 %v790
          %1019 = vmatprep.subr.mxu0 0.0
          %1020 = vmatpush1.msra.mxu0 %v789
          %1021 = vmatprep.subr.mxu0 0.0
          %1022 = vmatpush1.msra.mxu0 %v788
          %1023 = vmatprep.subr.mxu0 0.0
          %1024 = vmatpush1.msra.mxu0 %v787
          %1025 = vmatprep.subr.mxu0 0.0
          %1026 = vmatpush1.msra.mxu0 %v786
          %1027 = vmatprep.subr.mxu0 0.0
          %1028 = vmatpush2.msra.mxu0 0.0
          %1029 = vmatprep.subr.mxu0 0.0
          %1030 = vmatpush2.msra.mxu0 0.0
          %1031 = vmatprep.subr.mxu0 0.0
          %1032 = vmatpush2.msra.mxu0 0.0
          %1033 = vmatprep.subr.mxu0 0.0
          %1034 = vmatpush2.msra.mxu0 0.0
          %1035 = vmatprep.subr.mxu0 0.0
          %1036 = vmatpush2.msra.mxu0 0.0
          %1037 = vmatprep.subr.mxu0 0.0
          %1038 = vmatpush2.msra.mxu0 0.0
          %1039 = vmatprep.subr.mxu0 0.0
          %1040 = vmatpush2.msra.mxu0 0.0
          %1041 = vmatprep.subr.mxu0 0.0
          %1042 = vmatpush2.msra.mxu0 0.0
          %1043 = vmatprep.subr.mxu0 0.0
          %1044 = vmatpush2.msra.mxu0 0.0
          %1045 = vmatprep.subr.mxu0 0.0
          %1046 = vmatpush2.msra.mxu0 0.0
          %1047 = vmatprep.subr.mxu0 0.0
          %1048 = vmatpush2.msra.mxu0 0.0
          %1049 = vmatprep.subr.mxu0 0.0
          %1050 = vmatpush2.msra.mxu0 0.0
          %1051 = vmatprep.subr.mxu0 0.0
          %1052 = vmatpush2.msra.mxu0 0.0
          %1053 = vmatprep.subr.mxu0 0.0
          %1054 = vmatpush2.msra.mxu0 0.0
          %1055 = vmatprep.subr.mxu0 0.0
          %1056 = vmatpush2.msra.mxu0 0.0
          %1057 = vmatprep.subr.mxu0 0.0
          %1058 = vmatpush2.msra.mxu0 0.0
          %1059 = vmatprep.mubr.f32.mxu0 0.0
          %1060 = vmatmul.mubr.f32.gmra.mxu0 %v770
          %v1061 = vpop.f32.mrf.mxu0
          %v1062 = vadd.f32 %v917, %v1061
          %v1063 = vpop.f32.mrf.mxu0
          %1064 = vmatprep.mubr.f32.mxu0 0.0
          %1065 = vmatmul.mubr.f32.gmra.mxu0 %v771
          %v1066 = vpop.f32.mrf.mxu0
          %v1067 = vadd.f32 %v922, %v1066
          %v1068 = vpop.f32.mrf.mxu0
          %1069 = vmatprep.mubr.f32.mxu0 0.0
          %1070 = vmatmul.mubr.f32.gmra.mxu0 %v772
          %v1071 = vpop.f32.mrf.mxu0
          %v1072 = vadd.f32 %v927, %v1071
          %v1073 = vpop.f32.mrf.mxu0
          %1074 = vmatprep.mubr.f32.mxu0 0.0
          %1075 = vmatmul.mubr.f32.gmra.mxu0 %v773
          %v1076 = vpop.f32.mrf.mxu0
          %v1077 = vadd.f32 %v932, %v1076
          %v1078 = vpop.f32.mrf.mxu0
          %1079 = vmatprep.mubr.f32.mxu0 0.0
          %1080 = vmatmul.mubr.f32.gmra.mxu0 %v774
          %v1081 = vpop.f32.mrf.mxu0
          %v1082 = vadd.f32 %v937, %v1081
          %v1083 = vpop.f32.mrf.mxu0
          %1084 = vmatprep.mubr.f32.mxu0 0.0
          %1085 = vmatmul.mubr.f32.gmra.mxu0 %v775
          %v1086 = vpop.f32.mrf.mxu0
          %v1087 = vadd.f32 %v942, %v1086
          %v1088 = vpop.f32.mrf.mxu0
          %1089 = vmatprep.mubr.f32.mxu0 0.0
          %1090 = vmatmul.mubr.f32.gmra.mxu0 %v776
          %v1091 = vpop.f32.mrf.mxu0
          %v1092 = vadd.f32 %v947, %v1091
          %v1093 = vpop.f32.mrf.mxu0
          %1094 = vmatprep.mubr.f32.mxu0 0.0
          %1095 = vmatmul.mubr.f32.gmra.mxu0 %v777
          %v1096 = vpop.f32.mrf.mxu0
          %v1097 = vadd.f32 %v952, %v1096
          %v1098 = vpop.f32.mrf.mxu0
          %1099 = vmatprep.mubr.f32.mxu0 0.0
          %1100 = vmatmul.mubr.f32.gmra.mxu0 %v778
          %v1101 = vpop.f32.mrf.mxu0
          %v1102 = vadd.f32 %v957, %v1101
          %v1103 = vpop.f32.mrf.mxu0
          %1104 = vmatprep.mubr.f32.mxu0 0.0
          %1105 = vmatmul.mubr.f32.gmra.mxu0 %v779
          %v1106 = vpop.f32.mrf.mxu0
          %v1107 = vadd.f32 %v962, %v1106
          %v1108 = vpop.f32.mrf.mxu0
          %1109 = vmatprep.mubr.f32.mxu0 0.0
          %1110 = vmatmul.mubr.f32.gmra.mxu0 %v780
          %v1111 = vpop.f32.mrf.mxu0
          %v1112 = vadd.f32 %v967, %v1111
          %v1113 = vpop.f32.mrf.mxu0
          %1114 = vmatprep.mubr.f32.mxu0 0.0
          %1115 = vmatmul.mubr.f32.gmra.mxu0 %v781
          %v1116 = vpop.f32.mrf.mxu0
          %v1117 = vadd.f32 %v972, %v1116
          %v1118 = vpop.f32.mrf.mxu0
          %1119 = vmatprep.mubr.f32.mxu0 0.0
          %1120 = vmatmul.mubr.f32.gmra.mxu0 %v782
          %v1121 = vpop.f32.mrf.mxu0
          %v1122 = vadd.f32 %v977, %v1121
          %v1123 = vpop.f32.mrf.mxu0
          %1124 = vmatprep.mubr.f32.mxu0 0.0
          %1125 = vmatmul.mubr.f32.gmra.mxu0 %v783
          %v1126 = vpop.f32.mrf.mxu0
          %v1127 = vadd.f32 %v982, %v1126
          %v1128 = vpop.f32.mrf.mxu0
          %1129 = vmatprep.mubr.f32.mxu0 0.0
          %1130 = vmatmul.mubr.f32.gmra.mxu0 %v784
          %v1131 = vpop.f32.mrf.mxu0
          %v1132 = vadd.f32 %v987, %v1131
          %v1133 = vpop.f32.mrf.mxu0
          %1134 = vmatprep.mubr.f32.mxu0 0.0
          %1135 = vmatmul.mubr.f32.gmra.mxu0 %v785
          %v1136 = vpop.f32.mrf.mxu0
          %v1137 = vadd.f32 %v992, %v1136
          %v1138 = vpop.f32.mrf.mxu0
          %1139 = vdwg.mxu0
          %v1140 = vld [vmem:[%s5] sm:$0x1]
          %v1142 = vlaneseq
          %v1143 = vshrl.u32 %v1142, 7
          %v1144 = vsub.s32 0, %v1143
          %v1145 = vrot.slane %v1140, %v1144
          %v1147 = vadd.f32 %v1062, %v1145
          %v1148 = vadd.f32 %v1067, %v1145
          %v1149 = vadd.f32 %v1072, %v1145
          %v1150 = vadd.f32 %v1077, %v1145
          %v1151 = vadd.f32 %v1082, %v1145
          %v1152 = vadd.f32 %v1087, %v1145
          %v1153 = vadd.f32 %v1092, %v1145
          %v1154 = vadd.f32 %v1097, %v1145
          %v1155 = vadd.f32 %v1102, %v1145
          %v1156 = vadd.f32 %v1107, %v1145
          %v1157 = vadd.f32 %v1112, %v1145
          %v1158 = vadd.f32 %v1117, %v1145
          %v1159 = vadd.f32 %v1122, %v1145
          %v1160 = vadd.f32 %v1127, %v1145
          %v1161 = vadd.f32 %v1132, %v1145
          %v1162 = vadd.f32 %v1137, %v1145
          %v1163 = vmax.f32 %v1147, 0.0
          %v1164 = vmax.f32 %v1148, 0.0
          %v1165 = vmax.f32 %v1149, 0.0
          %v1166 = vmax.f32 %v1150, 0.0
          %v1167 = vmax.f32 %v1151, 0.0
          %v1168 = vmax.f32 %v1152, 0.0
          %v1169 = vmax.f32 %v1153, 0.0
          %v1170 = vmax.f32 %v1154, 0.0
          %v1171 = vmax.f32 %v1155, 0.0
          %v1172 = vmax.f32 %v1156, 0.0
          %v1173 = vmax.f32 %v1157, 0.0
          %v1174 = vmax.f32 %v1158, 0.0
          %v1175 = vmax.f32 %v1159, 0.0
          %v1176 = vmax.f32 %v1160, 0.0
          %v1177 = vmax.f32 %v1161, 0.0
          %v1178 = vmax.f32 %v1162, 0.0
          %v1179 = vpack.c.bf16 %v1164, %v1163
          %v1180 = vpack.c.bf16 %v1166, %v1165
          %v1181 = vpack.c.bf16 %v1168, %v1167
          %v1182 = vpack.c.bf16 %v1170, %v1169
          %v1183 = vpack.c.bf16 %v1172, %v1171
          %v1184 = vpack.c.bf16 %v1174, %v1173
          %v1185 = vpack.c.bf16 %v1176, %v1175
          %v1186 = vpack.c.bf16 %v1178, %v1177
          %v1195 = vunpack.c.l.b16 %v1179
          %v1196 = vunpack.c.h.b16 %v1179
          %v1197 = vunpack.c.l.b16 %v1180
          %v1198 = vunpack.c.h.b16 %v1180
          %v1199 = vunpack.c.l.b16 %v1181
          %v1200 = vunpack.c.h.b16 %v1181
          %v1201 = vunpack.c.l.b16 %v1182
          %v1202 = vunpack.c.h.b16 %v1182
          %v1203 = vunpack.c.l.b16 %v1183
          %v1204 = vunpack.c.h.b16 %v1183
          %v1205 = vunpack.c.l.b16 %v1184
          %v1206 = vunpack.c.h.b16 %v1184
          %v1207 = vunpack.c.l.b16 %v1185
          %v1208 = vunpack.c.h.b16 %v1185
          %v1209 = vunpack.c.l.b16 %v1186
          %v1210 = vunpack.c.h.b16 %v1186
          %v1211 = vpack.c.b16 %v1195, %v1195
          %v1212 = vpack.c.b16 %v1196, %v1196
          %v1213 = vpack.c.b16 %v1197, %v1197
          %v1214 = vpack.c.b16 %v1198, %v1198
          %v1215 = vpack.c.b16 %v1199, %v1199
          %v1216 = vpack.c.b16 %v1200, %v1200
          %v1217 = vpack.c.b16 %v1201, %v1201
          %v1218 = vpack.c.b16 %v1202, %v1202
          %v1219 = vpack.c.b16 %v1203, %v1203
          %v1220 = vpack.c.b16 %v1204, %v1204
          %v1221 = vpack.c.b16 %v1205, %v1205
          %v1222 = vpack.c.b16 %v1206, %v1206
          %v1223 = vpack.c.b16 %v1207, %v1207
          %v1224 = vpack.c.b16 %v1208, %v1208
          %v1225 = vpack.c.b16 %v1209, %v1209
          %v1226 = vpack.c.b16 %v1210, %v1210
          %1243 = vst [vmem:[%s367] sm:$0xf] %v1211
          %1244 = vst [vmem:[%s367 + $0x4] sm:$0xf] %v1212
          %1245 = vst [vmem:[%s367 + $0x8] sm:$0xf] %v1213
          %1246 = vst [vmem:[%s367 + $0xc] sm:$0xf] %v1214
          %1247 = vst [vmem:[%s367 + $0x10] sm:$0xf] %v1215
          %1248 = vst [vmem:[%s367 + $0x14] sm:$0xf] %v1216
          %1249 = vst [vmem:[%s367 + $0x18] sm:$0xf] %v1217
          %1250 = vst [vmem:[%s367 + $0x1c] sm:$0xf] %v1218
          %1251 = vst [vmem:[%s367 + $0x20] sm:$0xf] %v1219
          %1252 = vst [vmem:[%s367 + $0x24] sm:$0xf] %v1220
          %1253 = vst [vmem:[%s367 + $0x28] sm:$0xf] %v1221
          %1254 = vst [vmem:[%s367 + $0x2c] sm:$0xf] %v1222
          %1255 = vst [vmem:[%s367 + $0x30] sm:$0xf] %v1223
          %1256 = vst [vmem:[%s367 + $0x34] sm:$0xf] %v1224
          %1257 = vst [vmem:[%s367 + $0x38] sm:$0xf] %v1225
          %1258 = vst [vmem:[%s367 + $0x3c] sm:$0xf] %v1226
        $region72: #{tpu_custom_call.1} parent=43 // pred_fallthru
          _
        %s1259 = sand.u32 %s183, 1
        %s1260 = scalar_lea.sflag [#allocation5], %s1259
        %s1261 = sand.u32 %s183, 1
        %s1262 = smul.addr %s1261, 64
        %s1263 = scalar_lea.vmem [#allocation12], %s1262
        // Predicated region
        $region73: #{tpu_custom_call.1} parent=43 // pred_check
          %p1264 = pneg %p193
        $region74: #{tpu_custom_call.1} parent=43 // pred_check_branch
          %1266 = sbr.rel (%p1264) target = $region76
        $region75: #{tpu_custom_call.1} parent=43 // pred_region
          %s1267 = smul.u32 16, %s29
          %s1269 = ssub.s32 1024, 1024
          %1270 = vsyncadd %s1260, %s1269
          %s1271 = smul.addr %s1267, 64
          %s1272 = scalar_lea.hbm %s6, %s1271
          %s1273 = sshll.u32 %s1263, 4
          %s1274 = int_to_ptr.vmem [resolvable:$true] %s1273
          %1279 = dma.vmem_to_hbm [thread:$0]  %s1274, 1024, %s1272, %s1260, 64, 64, 4
        $region76: #{tpu_custom_call.1} parent=43 // pred_fallthru
          _
      $region44: #{tpu_custom_call.1} parent=5 // pred_fallthru
        _
      %p1280 = scmp.le.s32.totalorder 2, %s20
      // Predicated region
      $region77: #{tpu_custom_call.1} parent=5 // pred_check
        %p1281 = pneg %p1280
      $region78: #{tpu_custom_call.1} parent=5 // pred_check_branch
        %1283 = sbr.rel (%p1281) target = $region80
      $region79: #{tpu_custom_call.1} parent=5 // pred_region
        %s1284 = ssub.s32 %s20, 2
        // Predicated region
        $region81: #{tpu_custom_call.1} parent=79 // pred_check
          %p1285 = pneg %p199
        $region82: #{tpu_custom_call.1} parent=79 // pred_check_branch
          %1287 = sbr.rel (%p1285) target = $region84
        $region83: #{tpu_custom_call.1} parent=79 // pred_region
          %s1288 = sand.u32 %s184, 1
          %s1289 = scalar_lea.sflag [#allocation5], %s1288
          %s1290 = sand.u32 %s184, 1
          %s1291 = smul.addr %s1290, 64
          %s1292 = scalar_lea.vmem [#allocation12], %s1291
          %1293 = dma.done %s1289, 1024
        $region84: #{tpu_custom_call.1} parent=79 // pred_fallthru
          _
      $region80: #{tpu_custom_call.1} parent=5 // pred_fallthru
        _
    $region6: #{tpu_custom_call.1} parent=1 // loop_footer
      %s24 = sadd.s32 1, %s20
    $region7: #{tpu_custom_call.1} parent=1 // loop_footer_branch
      %19 = sbr.rel target = $region3
    $region8: #{tpu_custom_call.1} parent=1 // loop_exit
      _
    %1294 = vsyncpa [#allocation4], 1
    %s1295 = scalar_lea.sflag [#allocation4], 1
    %1296 = vsyncpa %s1295, 1
    %1297 = vsyncpa [#allocation7], 1
    %1298 = vsyncpa [#allocation11], 1
    %1299 = vsyncpa [#allocation5], 1
    %s1300 = scalar_lea.sflag [#allocation5], 1
    %1301 = vsyncpa %s1300, 1

</llo_original>
